<compile_context>
chip_gen: v7x
topology: tpu7x:2x2x1
jax: 0.10.0
libtpu: 0.0.40
codegen_flags: <defaults>
</compile_context>

<pallas_src>
import functools

import numpy as np
import jax
import jax.numpy as jnp
from jax import lax
from jax.experimental import pallas as pl
from jax.experimental.pallas import tpu as pltpu


def _box_sampler_kernel(inp_ref, tgt_ref, out_ref, *,
                        low_thresh, high_thresh, bounds, n_valid):
    """inp_ref: (4, Np)  rows = (xc, yc, w, h), boxes on lanes (cols >= n_valid are pad).
       tgt_ref: (M, 4)   target boxes on sublanes.
       out_ref: (4, Np)  rows = (max_iou, argmax_idx, pos_mask, neg_mask)."""
    ib = inp_ref[...]                       # (4, Np)
    tb = tgt_ref[...]                       # (M, 4)
    n_pad = ib.shape[1]
    m = tb.shape[0]

    # xcycwh -> x1y1x2y2; per-input terms are lane-dense (1, Np) rows
    ihw = ib[2:3, :] * 0.5
    ihh = ib[3:4, :] * 0.5
    ix1 = ib[0:1, :] - ihw
    iy1 = ib[1:2, :] - ihh
    ix2 = ib[0:1, :] + ihw
    iy2 = ib[1:2, :] + ihh

    # per-target terms are (M, 1) columns
    thw = tb[:, 2:3] * 0.5
    thh = tb[:, 3:4] * 0.5
    tx1 = tb[:, 0:1] - thw
    ty1 = tb[:, 1:2] - thh
    tx2 = tb[:, 0:1] + thw
    ty2 = tb[:, 1:2] + thh

    # pairwise IoU (torchvision.ops.box_iou semantics), (M, Np)
    iw = jnp.maximum(jnp.minimum(ix2, tx2) - jnp.maximum(ix1, tx1), 0.0)
    ih = jnp.maximum(jnp.minimum(iy2, ty2) - jnp.maximum(iy1, ty1), 0.0)
    inter = iw * ih
    area_i = (ix2 - ix1) * (iy2 - iy1)      # (1, Np)
    area_t = (tx2 - tx1) * (ty2 - ty1)      # (M, 1)
    ious = inter / (area_i + area_t - inter)   # exact divide (thresholds nearby)

    lane1 = lax.broadcasted_iota(jnp.int32, (1, n_pad), 1)     # (1, Np)
    valid = lane1 < n_valid
    lane = lax.broadcasted_iota(jnp.int32, (m, n_pad), 1)
    subl = lax.broadcasted_iota(jnp.int32, (m, n_pad), 0)

    # padded columns never win an argmax and never pollute reductions with NaN
    ious = jnp.where(valid, ious, -1.0)

    # max / argmax over targets (sublane reduce) -> per input box, (1, Np)
    input_max = jnp.max(ious, axis=0, keepdims=True)
    input_idx = jnp.min(jnp.where(ious == input_max, subl, m),
                        axis=0, keepdims=True)
    # max / argmax over inputs (lane reduce)     -> per target box, (M, 1)
    target_max = jnp.max(ious, axis=1, keepdims=True)
    target_idx = jnp.min(jnp.where(ious == target_max, lane, n_pad),
                         axis=1, keepdims=True)

    pos = input_max > high_thresh           # (1, Np)
    neg = input_max < low_thresh

    # bounds filtering (setBounds). Applied BEFORE the target-argmax override,
    # exactly like the torch module (an out-of-bounds best-match box still ends
    # up positive). Skipped entirely at trace time when no bounds are set.
    if bounds is not None:
        x_min, y_min, x_max, y_max = bounds
        oob = (ix1 < x_min) | (iy1 < y_min) | (ix2 > x_max) | (iy2 > y_max)
        keep = jnp.logical_not(oob)
        pos = pos & keep
        neg = neg & keep

    # pos_mask[target_idx] = 1 ; neg_mask[target_idx] = 0 (scatter as vectorized any)
    matched = jnp.any(lane == target_idx, axis=0, keepdims=True)   # (1, Np)
    pos = (pos | matched) & valid
    neg = neg & jnp.logical_not(matched) & valid

    pos_f = pos.astype(jnp.float32)
    neg_f = neg.astype(jnp.float32)
    # torch: if neg_mask.sum()==0: neg_mask = neg_mask.mul(-pos_mask).add(1)
    # neg_mask is all-zero in that branch, so the result is all ones (real boxes).
    neg_f = jnp.where(jnp.sum(neg_f) == 0.0, valid.astype(jnp.float32), neg_f)

    # single fused lane-dense output slab (one writeback DMA)
    out_ref[0:1, :] = input_max
    out_ref[1:2, :] = input_idx.astype(jnp.float32)
    out_ref[2:3, :] = pos_f
    out_ref[3:4, :] = neg_f


def _box_sampler_masks(inp, tgt, *, low_thresh, high_thresh, bounds, n_valid):
    """inp: (B, 4, N_pad) f32; tgt: (B, M, 4) f32 -> (B, 4, N_pad) f32 slab."""
    b, _, n_pad = inp.shape
    m = tgt.shape[1]
    kernel = functools.partial(_box_sampler_kernel,
                               low_thresh=low_thresh, high_thresh=high_thresh,
                               bounds=bounds, n_valid=n_valid)
    return pl.pallas_call(
        kernel,
        out_shape=jax.ShapeDtypeStruct((b, 4, n_pad), jnp.float32),
        grid=(b,),
        in_specs=[pl.BlockSpec((None, 4, n_pad), lambda i: (i, 0, 0)),
                  pl.BlockSpec((None, m, 4), lambda i: (i, 0, 0))],
        out_specs=pl.BlockSpec((None, 4, n_pad), lambda i: (i, 0, 0)),
        compiler_params=pltpu.CompilerParams(
            dimension_semantics=("parallel",)),   # batch/tile axis -> both v7x TCs
    )(inp, tgt)


@functools.partial(jax.jit,
                   static_argnames=("low_thresh", "high_thresh",
                                    "batch_size", "bounds"))
def _box_sampler_device(input_boxes, target_boxes, key, *,
                        low_thresh, high_thresh, batch_size, bounds):
    """Everything except the final variable-length slice runs on device."""
    b, n, _ = input_boxes.shape
    n_pad = max(128, ((n + 127) // 128) * 128)

    # single layout-prep step: box index onto lanes, pad to a lane multiple
    inp = jnp.transpose(input_boxes.astype(jnp.float32), (0, 2, 1))      # (B, 4, N)
    inp = jnp.pad(inp, ((0, 0), (0, 0), (0, n_pad - n)))                 # (B, 4, Np)
    tgt = target_boxes.astype(jnp.float32)                               # (B, M, 4)

    out = _box_sampler_masks(inp, tgt, low_thresh=low_thresh,
                             high_thresh=high_thresh, bounds=bounds, n_valid=n)
    out0 = out[0]                          # module is batch-1 (squeeze(0))
    input_idx = out0[1, :n].astype(jnp.int32)
    pos = out0[2, :n] > 0.5
    neg = out0[3, :n] > 0.5

    half = batch_size // 2
    kp, kn, kr = jax.random.split(key, 3)
    total_pos = jnp.sum(pos.astype(jnp.int32))
    total_neg = jnp.sum(neg.astype(jnp.int32))
    num_pos = jnp.minimum(half, total_pos)
    num_neg = batch_size - num_pos

    # uniform multinomial WITHOUT replacement == random permutation of the set:
    # give each member a random key, sort ascending, members come first.
    rp = jax.random.uniform(kp, (n,))
    pos_order = jnp.argsort(jnp.where(pos, -rp, 1.0)).astype(jnp.int32)
    pos_input_full = pos_order[:half]                 # first num_pos entries valid
    pos_target_full = input_idx[pos_input_full]

    rn = jax.random.uniform(kn, (n,))
    neg_order = jnp.argsort(jnp.where(neg, -rn, 1.0)).astype(jnp.int32)
    take = jnp.minimum(jnp.arange(batch_size), n - 1)
    neg_wo_repl = neg_order[take]                     # without replacement
    draws = jax.random.randint(kr, (batch_size,), 0, jnp.maximum(total_neg, 1))
    neg_w_repl = neg_order[draws]                     # with replacement (iid)
    neg_input_full = jnp.where(total_neg >= num_neg, neg_wo_repl, neg_w_repl)

    return pos_input_full, pos_target_full, neg_input_full, num_pos


def box_sampler_forward(input_boxes, target_boxes, *,
                        low_thresh=0.3, high_thresh=0.7, batch_size=256,
                        bounds=(None, None, None, None), seed=0):
    if bounds is None or any(v is None for v in bounds):
        bounds_static = None       # trace-time specialization: skip the oob block
    else:
        bounds_static = tuple(float(v) for v in bounds)

    key = jax.random.PRNGKey(seed)
    pos_full, pos_tgt_full, neg_full, num_pos = jax.block_until_ready(
        _box_sampler_device(input_boxes, target_boxes, key,
                            low_thresh=float(low_thresh),
                            high_thresh=float(high_thresh),
                            batch_size=int(batch_size),
                            bounds=bounds_static))

    # TODO(synk): the module returns variable-length index lists (torch.nonzero /
    # torch.multinomial); this final dynamic-shape slice is the only host step left.
    num_pos = int(num_pos)
    num_neg = int(batch_size) - num_pos
    pos_input_idx = np.asarray(pos_full)[:num_pos]
    pos_target_idx = np.asarray(pos_tgt_full)[:num_pos]
    neg_input_idx = np.asarray(neg_full)[:num_neg]
    return [pos_input_idx, pos_target_idx, neg_input_idx]


if __name__ == "__main__":
    N, M = 64, 16            # N input (anchor) boxes, M target (gt) boxes
    batch_size = 16
    key = jax.random.PRNGKey(0)
    k1, k2, k3, k4 = jax.random.split(key, 4)

    # boxes in xcycwh format, batch dim of 1 (matches the squeeze(0) in the module)
    in_centers = jax.random.uniform(k1, (1, N, 2), minval=2.0, maxval=14.0)
    in_wh = jax.random.uniform(k2, (1, N, 2), minval=1.0, maxval=6.0)
    input_boxes = jnp.concatenate([in_centers, in_wh], axis=-1)            # (1, N, 4)

    tg_centers = jax.random.uniform(k3, (1, M, 2), minval=2.0, maxval=14.0)
    tg_wh = jax.random.uniform(k4, (1, M, 2), minval=1.0, maxval=6.0)
    target_boxes = jnp.concatenate([tg_centers, tg_wh], axis=-1)           # (1, M, 4)

    out = box_sampler_forward(
        input_boxes, target_boxes,
        low_thresh=0.3, high_thresh=0.7, batch_size=batch_size,
        bounds=(0.0, 0.0, 16.0, 16.0), seed=0)

    pos_input_idx, pos_target_idx, neg_input_idx = out
    assert pos_input_idx.shape[0] + neg_input_idx.shape[0] == batch_size
    assert pos_target_idx.shape == pos_input_idx.shape
    assert pos_target_idx.size == 0 or int(pos_target_idx.max()) < M
    print("KERNEL_OK")
</pallas_src>

<mosaic_0001>
module attributes {stable_mosaic.version = 11 : i64} {
  func.func @_box_sampler_kernel(%arg0: i32, %arg1: memref<1x4x128xf32, #tpu.memory_space<vmem>>, %arg2: memref<1x16x4xf32, #tpu.memory_space<vmem>>, %arg3: memref<1x4x128xf32, #tpu.memory_space<vmem>>) attributes {dimension_semantics = [#tpu.dimension_semantics<parallel>], iteration_bounds = array<i64: 1>, scalar_prefetch = 0 : i64, scratch_operands = 0 : i64, tpu.core_type = #tpu.core_type<tc>, window_params = [{transform_indices = @transform_0, window_bounds = array<i64: 1, 4, 128>}, {transform_indices = @transform_1, window_bounds = array<i64: 1, 16, 4>}, {transform_indices = @transform_2, window_bounds = array<i64: 1, 4, 128>}]} {
    %c0 = arith.constant 0 : index
    %c0_0 = arith.constant 0 : index
    %c0_1 = arith.constant 0 : index
    %0 = vector.load %arg1[%c0, %c0_0, %c0_1] : memref<1x4x128xf32, #tpu.memory_space<vmem>>, vector<1x4x128xf32>
    %1 = vector.shape_cast %0 : vector<1x4x128xf32> to vector<4x128xf32>
    %c0_2 = arith.constant 0 : index
    %c0_3 = arith.constant 0 : index
    %c0_4 = arith.constant 0 : index
    %2 = vector.load %arg2[%c0_2, %c0_3, %c0_4] : memref<1x16x4xf32, #tpu.memory_space<vmem>>, vector<1x16x4xf32>
    %3 = vector.shape_cast %2 : vector<1x16x4xf32> to vector<16x4xf32>
    %4 = vector.extract_strided_slice %1 {offsets = [2, 0], sizes = [1, 128], strides = [1, 1]} : vector<4x128xf32> to vector<1x128xf32>
    %cst = arith.constant 5.000000e-01 : f32
    %5 = vector.broadcast %cst : f32 to vector<1x128xf32>
    %6 = arith.mulf %4, %5 : vector<1x128xf32>
    %7 = vector.extract_strided_slice %1 {offsets = [3, 0], sizes = [1, 128], strides = [1, 1]} : vector<4x128xf32> to vector<1x128xf32>
    %cst_5 = arith.constant 5.000000e-01 : f32
    %8 = vector.broadcast %cst_5 : f32 to vector<1x128xf32>
    %9 = arith.mulf %7, %8 : vector<1x128xf32>
    %10 = vector.extract_strided_slice %1 {offsets = [0, 0], sizes = [1, 128], strides = [1, 1]} : vector<4x128xf32> to vector<1x128xf32>
    %11 = arith.subf %10, %6 : vector<1x128xf32>
    %12 = vector.extract_strided_slice %1 {offsets = [1, 0], sizes = [1, 128], strides = [1, 1]} : vector<4x128xf32> to vector<1x128xf32>
    %13 = arith.subf %12, %9 : vector<1x128xf32>
    %14 = vector.extract_strided_slice %1 {offsets = [0, 0], sizes = [1, 128], strides = [1, 1]} : vector<4x128xf32> to vector<1x128xf32>
    %15 = arith.addf %14, %6 : vector<1x128xf32>
    %16 = vector.extract_strided_slice %1 {offsets = [1, 0], sizes = [1, 128], strides = [1, 1]} : vector<4x128xf32> to vector<1x128xf32>
    %17 = arith.addf %16, %9 : vector<1x128xf32>
    %18 = vector.extract_strided_slice %3 {offsets = [0, 2], sizes = [16, 1], strides = [1, 1]} : vector<16x4xf32> to vector<16x1xf32>
    %cst_6 = arith.constant 5.000000e-01 : f32
    %19 = vector.broadcast %cst_6 : f32 to vector<16x1xf32>
    %20 = arith.mulf %18, %19 : vector<16x1xf32>
    %21 = vector.extract_strided_slice %3 {offsets = [0, 3], sizes = [16, 1], strides = [1, 1]} : vector<16x4xf32> to vector<16x1xf32>
    %cst_7 = arith.constant 5.000000e-01 : f32
    %22 = vector.broadcast %cst_7 : f32 to vector<16x1xf32>
    %23 = arith.mulf %21, %22 : vector<16x1xf32>
    %24 = vector.extract_strided_slice %3 {offsets = [0, 0], sizes = [16, 1], strides = [1, 1]} : vector<16x4xf32> to vector<16x1xf32>
    %25 = arith.subf %24, %20 : vector<16x1xf32>
    %26 = vector.extract_strided_slice %3 {offsets = [0, 1], sizes = [16, 1], strides = [1, 1]} : vector<16x4xf32> to vector<16x1xf32>
    %27 = arith.subf %26, %23 : vector<16x1xf32>
    %28 = vector.extract_strided_slice %3 {offsets = [0, 0], sizes = [16, 1], strides = [1, 1]} : vector<16x4xf32> to vector<16x1xf32>
    %29 = arith.addf %28, %20 : vector<16x1xf32>
    %30 = vector.extract_strided_slice %3 {offsets = [0, 1], sizes = [16, 1], strides = [1, 1]} : vector<16x4xf32> to vector<16x1xf32>
    %31 = arith.addf %30, %23 : vector<16x1xf32>
    %32 = vector.broadcast %15 : vector<1x128xf32> to vector<16x128xf32>
    %33 = vector.broadcast %29 : vector<16x1xf32> to vector<16x128xf32>
    %34 = arith.minimumf %32, %33 : vector<16x128xf32>
    %35 = vector.broadcast %11 : vector<1x128xf32> to vector<16x128xf32>
    %36 = vector.broadcast %25 : vector<16x1xf32> to vector<16x128xf32>
    %37 = arith.maximumf %35, %36 : vector<16x128xf32>
    %38 = arith.subf %34, %37 : vector<16x128xf32>
    %cst_8 = arith.constant 0.000000e+00 : f32
    %39 = vector.broadcast %cst_8 : f32 to vector<16x128xf32>
    %40 = arith.maximumf %38, %39 : vector<16x128xf32>
    %41 = vector.broadcast %17 : vector<1x128xf32> to vector<16x128xf32>
    %42 = vector.broadcast %31 : vector<16x1xf32> to vector<16x128xf32>
    %43 = arith.minimumf %41, %42 : vector<16x128xf32>
    %44 = vector.broadcast %13 : vector<1x128xf32> to vector<16x128xf32>
    %45 = vector.broadcast %27 : vector<16x1xf32> to vector<16x128xf32>
    %46 = arith.maximumf %44, %45 : vector<16x128xf32>
    %47 = arith.subf %43, %46 : vector<16x128xf32>
    %cst_9 = arith.constant 0.000000e+00 : f32
    %48 = vector.broadcast %cst_9 : f32 to vector<16x128xf32>
    %49 = arith.maximumf %47, %48 : vector<16x128xf32>
    %50 = arith.mulf %40, %49 : vector<16x128xf32>
    %51 = arith.subf %15, %11 : vector<1x128xf32>
    %52 = arith.subf %17, %13 : vector<1x128xf32>
    %53 = arith.mulf %51, %52 : vector<1x128xf32>
    %54 = arith.subf %29, %25 : vector<16x1xf32>
    %55 = arith.subf %31, %27 : vector<16x1xf32>
    %56 = arith.mulf %54, %55 : vector<16x1xf32>
    %57 = vector.broadcast %53 : vector<1x128xf32> to vector<16x128xf32>
    %58 = vector.broadcast %56 : vector<16x1xf32> to vector<16x128xf32>
    %59 = arith.addf %57, %58 : vector<16x128xf32>
    %60 = arith.subf %59, %50 : vector<16x128xf32>
    %61 = arith.divf %50, %60 : vector<16x128xf32>
    %62 = tpu.iota {dimensions = array<i32: 1>} : vector<1x128xi32>
    %c64_i32 = arith.constant 64 : i32
    %63 = vector.broadcast %c64_i32 : i32 to vector<1x128xi32>
    %64 = arith.cmpi slt, %62, %63 : vector<1x128xi32>
    %65 = tpu.iota {dimensions = array<i32: 1>} : vector<16x128xi32>
    %66 = tpu.iota {dimensions = array<i32: 0>} : vector<16x128xi32>
    %cst_10 = arith.constant -1.000000e+00 : f32
    %67 = vector.shape_cast %64 : vector<1x128xi1> to vector<1x128xi1>
    %68 = vector.broadcast %67 : vector<1x128xi1> to vector<16x128xi1>
    %69 = vector.broadcast %cst_10 : f32 to vector<16x128xf32>
    %70 = arith.select %68, %61, %69 : vector<16x128xi1>, vector<16x128xf32>
    %cst_11 = arith.constant dense<0xFF800000> : vector<128xf32>
    %71 = vector.multi_reduction <maximumf>, %70, %cst_11 [0] : vector<16x128xf32> to vector<128xf32>
    %72 = vector.shape_cast %71 : vector<128xf32> to vector<1x128xf32>
    %73 = vector.broadcast %72 : vector<1x128xf32> to vector<16x128xf32>
    %74 = arith.cmpf oeq, %70, %73 : vector<16x128xf32>
    %c16_i32 = arith.constant 16 : i32
    %75 = vector.broadcast %c16_i32 : i32 to vector<16x128xi32>
    %76 = arith.select %74, %66, %75 : vector<16x128xi1>, vector<16x128xi32>
    %cst_12 = arith.constant dense<2147483647> : vector<128xi32>
    %77 = vector.multi_reduction <minsi>, %76, %cst_12 [0] : vector<16x128xi32> to vector<128xi32>
    %78 = vector.shape_cast %77 : vector<128xi32> to vector<1x128xi32>
    %cst_13 = arith.constant dense<0xFF800000> : vector<16xf32>
    %79 = vector.multi_reduction <maximumf>, %70, %cst_13 [1] : vector<16x128xf32> to vector<16xf32>
    %80 = vector.shape_cast %79 : vector<16xf32> to vector<16x1xf32>
    %81 = vector.broadcast %80 : vector<16x1xf32> to vector<16x128xf32>
    %82 = arith.cmpf oeq, %70, %81 : vector<16x128xf32>
    %c128_i32 = arith.constant 128 : i32
    %83 = vector.broadcast %c128_i32 : i32 to vector<16x128xi32>
    %84 = arith.select %82, %65, %83 : vector<16x128xi1>, vector<16x128xi32>
    %cst_14 = arith.constant dense<2147483647> : vector<16xi32>
    %85 = vector.multi_reduction <minsi>, %84, %cst_14 [1] : vector<16x128xi32> to vector<16xi32>
    %86 = vector.shape_cast %85 : vector<16xi32> to vector<16x1xi32>
    %cst_15 = arith.constant 0.699999988 : f32
    %87 = vector.broadcast %cst_15 : f32 to vector<1x128xf32>
    %88 = arith.cmpf ogt, %72, %87 : vector<1x128xf32>
    %cst_16 = arith.constant 3.000000e-01 : f32
    %89 = vector.broadcast %cst_16 : f32 to vector<1x128xf32>
    %90 = arith.cmpf olt, %72, %89 : vector<1x128xf32>
    %cst_17 = arith.constant 0.000000e+00 : f32
    %91 = vector.broadcast %cst_17 : f32 to vector<1x128xf32>
    %92 = arith.cmpf olt, %11, %91 : vector<1x128xf32>
    %cst_18 = arith.constant 0.000000e+00 : f32
    %93 = vector.broadcast %cst_18 : f32 to vector<1x128xf32>
    %94 = arith.cmpf olt, %13, %93 : vector<1x128xf32>
    %95 = arith.ori %92, %94 : vector<1x128xi1>
    %cst_19 = arith.constant 1.600000e+01 : f32
    %96 = vector.broadcast %cst_19 : f32 to vector<1x128xf32>
    %97 = arith.cmpf ogt, %15, %96 : vector<1x128xf32>
    %98 = arith.ori %95, %97 : vector<1x128xi1>
    %cst_20 = arith.constant 1.600000e+01 : f32
    %99 = vector.broadcast %cst_20 : f32 to vector<1x128xf32>
    %100 = arith.cmpf ogt, %17, %99 : vector<1x128xf32>
    %101 = arith.ori %98, %100 : vector<1x128xi1>
    %cst_21 = arith.constant dense<true> : vector<1x128xi1>
    %102 = arith.xori %101, %cst_21 : vector<1x128xi1>
    %103 = arith.andi %88, %102 : vector<1x128xi1>
    %104 = arith.andi %90, %102 : vector<1x128xi1>
    %105 = vector.broadcast %86 : vector<16x1xi32> to vector<16x128xi32>
    %106 = arith.cmpi eq, %65, %105 : vector<16x128xi32>
    %cst_22 = arith.constant 1.000000e+00 : f32
    %cst_23 = arith.constant 0.000000e+00 : f32
    %107 = vector.broadcast %cst_22 : f32 to vector<16x128xf32>
    %108 = vector.broadcast %cst_23 : f32 to vector<16x128xf32>
    %109 = arith.select %106, %107, %108 : vector<16x128xi1>, vector<16x128xf32>
    %cst_24 = arith.constant dense<0xFF800000> : vector<128xf32>
    %110 = vector.multi_reduction <maximumf>, %109, %cst_24 [0] : vector<16x128xf32> to vector<128xf32>
    %cst_25 = arith.constant 0.000000e+00 : f32
    %111 = vector.broadcast %cst_25 : f32 to vector<128xf32>
    %112 = arith.cmpf ogt, %110, %111 : vector<128xf32>
    %113 = vector.shape_cast %112 : vector<128xi1> to vector<1x128xi1>
    %114 = arith.ori %103, %113 : vector<1x128xi1>
    %115 = arith.andi %114, %64 : vector<1x128xi1>
    %cst_26 = arith.constant dense<true> : vector<1x128xi1>
    %116 = arith.xori %113, %cst_26 : vector<1x128xi1>
    %117 = arith.andi %104, %116 : vector<1x128xi1>
    %118 = arith.andi %117, %64 : vector<1x128xi1>
    %119 = arith.extui %115 : vector<1x128xi1> to vector<1x128xi32>
    %120 = arith.sitofp %119 : vector<1x128xi32> to vector<1x128xf32>
    %121 = arith.extui %118 : vector<1x128xi1> to vector<1x128xi32>
    %122 = arith.sitofp %121 : vector<1x128xi32> to vector<1x128xf32>
    %123 = vector.shape_cast %122 : vector<1x128xf32> to vector<1x1x128xf32>
    %cst_27 = arith.constant dense<0.000000e+00> : vector<1xf32>
    %124 = vector.multi_reduction <add>, %123, %cst_27 [1, 2] : vector<1x1x128xf32> to vector<1xf32>
    %125 = vector.shape_cast %124 : vector<1xf32> to vector<1x1x1xf32>
    %126 = vector.extract %125[0, 0, 0] : f32 from vector<1x1x1xf32>
    %cst_28 = arith.constant 0.000000e+00 : f32
    %127 = arith.cmpf oeq, %126, %cst_28 : f32
    %128 = arith.extui %64 : vector<1x128xi1> to vector<1x128xi32>
    %129 = arith.sitofp %128 : vector<1x128xi32> to vector<1x128xf32>
    %130 = arith.select %127, %129, %122 : vector<1x128xf32>
    %c0_29 = arith.constant 0 : index
    %c0_30 = arith.constant 0 : index
    %c0_31 = arith.constant 0 : index
    %131 = vector.load %arg3[%c0_29, %c0_30, %c0_31] : memref<1x4x128xf32, #tpu.memory_space<vmem>>, vector<1x1x128xf32>
    %132 = vector.shape_cast %131 : vector<1x1x128xf32> to vector<1x128xf32>
    %133 = vector.shape_cast %72 : vector<1x128xf32> to vector<1x1x128xf32>
    tpu.vector_store %arg3[%c0_29, %c0_30, %c0_31], %133 {strides = array<i32>} : memref<1x4x128xf32, #tpu.memory_space<vmem>>, vector<1x1x128xf32>,
    %134 = arith.sitofp %78 : vector<1x128xi32> to vector<1x128xf32>
    %c0_32 = arith.constant 0 : index
    %c1 = arith.constant 1 : index
    %c0_33 = arith.constant 0 : index
    %135 = vector.load %arg3[%c0_32, %c1, %c0_33] : memref<1x4x128xf32, #tpu.memory_space<vmem>>, vector<1x1x128xf32>
    %136 = vector.shape_cast %135 : vector<1x1x128xf32> to vector<1x128xf32>
    %137 = vector.shape_cast %134 : vector<1x128xf32> to vector<1x1x128xf32>
    tpu.vector_store %arg3[%c0_32, %c1, %c0_33], %137 {strides = array<i32>} : memref<1x4x128xf32, #tpu.memory_space<vmem>>, vector<1x1x128xf32>,
    %c0_34 = arith.constant 0 : index
    %c2 = arith.constant 2 : index
    %c0_35 = arith.constant 0 : index
    %138 = vector.load %arg3[%c0_34, %c2, %c0_35] : memref<1x4x128xf32, #tpu.memory_space<vmem>>, vector<1x1x128xf32>
    %139 = vector.shape_cast %138 : vector<1x1x128xf32> to vector<1x128xf32>
    %140 = vector.shape_cast %120 : vector<1x128xf32> to vector<1x1x128xf32>
    tpu.vector_store %arg3[%c0_34, %c2, %c0_35], %140 {strides = array<i32>} : memref<1x4x128xf32, #tpu.memory_space<vmem>>, vector<1x1x128xf32>,
    %c0_36 = arith.constant 0 : index
    %c3 = arith.constant 3 : index
    %c0_37 = arith.constant 0 : index
    %141 = vector.load %arg3[%c0_36, %c3, %c0_37] : memref<1x4x128xf32, #tpu.memory_space<vmem>>, vector<1x1x128xf32>
    %142 = vector.shape_cast %141 : vector<1x1x128xf32> to vector<1x128xf32>
    %143 = vector.shape_cast %130 : vector<1x128xf32> to vector<1x1x128xf32>
    tpu.vector_store %arg3[%c0_36, %c3, %c0_37], %143 {strides = array<i32>} : memref<1x4x128xf32, #tpu.memory_space<vmem>>, vector<1x1x128xf32>,
    return
  }
  func.func @transform_0(%arg0: i32) -> (i32, i32, i32) {
    %c0_i32 = arith.constant 0 : i32
    %c0_i32_0 = arith.constant 0 : i32
    %c0_i32_1 = arith.constant 0 : i32
    return %arg0, %c0_i32, %c0_i32_0 : i32, i32, i32
  }
  func.func @transform_1(%arg0: i32) -> (i32, i32, i32) {
    %c0_i32 = arith.constant 0 : i32
    %c0_i32_0 = arith.constant 0 : i32
    %c0_i32_1 = arith.constant 0 : i32
    return %arg0, %c0_i32, %c0_i32_0 : i32, i32, i32
  }
  func.func @transform_2(%arg0: i32) -> (i32, i32, i32) {
    %c0_i32 = arith.constant 0 : i32
    %c0_i32_0 = arith.constant 0 : i32
    %c0_i32_1 = arith.constant 0 : i32
    return %arg0, %c0_i32, %c0_i32_0 : i32, i32, i32
  }
}

</mosaic_0001>

<llo_original>
// kernel: _box_sampler_device.3
$region0: #{_box_sampler_device.3}
  #allocation0 [shape = 'u32[]', space=smem, size = 0x4, offset = 0x4, fixed_abs, tag = 'smem constant byte address 0x4 - core index']
  #allocation1 [shape = 'u32[144,128]{1,0:T(1,128)}', space=vmem, size = 0x12000, scoped, tag = 'internal scratch']
  %s0 = inlined_call_operand.vmem [shape: f32[1,4,128], index: 0, kind: input, shape index: {}]
  %s1 = inlined_call_operand.vmem [shape: f32[1,16,4], index: 1, kind: input, shape index: {}]
  %s2 = inlined_call_operand.vmem [shape: f32[1,4,128], index: 2, kind: output, shape index: {}]
  %s3 = sld [smem:[#allocation0]]
  $region18: #{_box_sampler_device.3} parent=0
    _
  %s5 = ssub.s32 1, %s3
  %s6 = scalar_select 0, %s5, %s3
  // Predicated region
  $region2: #{_box_sampler_device.3} parent=0 // pred_check
    _
  $region3: #{_box_sampler_device.3} parent=0 // pred_check_branch
    %8 = sbr.rel (0) target = $region5
  $region4: #{_box_sampler_device.3} parent=0 // pred_region
    _
  $region5: #{_box_sampler_device.3} parent=0 // pred_fallthru
    _
  // Predicated region
  $region6: #{_box_sampler_device.3} parent=0 // pred_check
    _
  $region7: #{_box_sampler_device.3} parent=0 // pred_check_branch
    %10 = sbr.rel (0) target = $region9
  $region8: #{_box_sampler_device.3} parent=0 // pred_region
    _
  $region9: #{_box_sampler_device.3} parent=0 // pred_fallthru
    _
  %v11 = vld [vmem:[%s0] sm:$0xf]
  %v12 = vld [vmem:[%s1] sm:$0xff]
  %v13 = vld [vmem:[%s1 + $0x8] sm:$0xff]
  %v14 = vmul.f32 %v11, 0.5
  %v16 = vrot.slane %v14, 2
  %v18 = vsub.f32 %v11, %v16
  %v19 = vadd.f32 %v11, %v16
  %v20 = vmul.f32 %v12, 0.5
  %v21 = vmul.f32 %v13, 0.5
  %24 = vrot.lane.b32.xlu0 %v20, 126
  %v25 = vpop.permute.xlu0 %24
  %26 = vrot.lane.b32.xlu0 %v21, 126
  %v27 = vpop.permute.xlu0 %26
  %v30 = vsub.f32 %v12, %v25
  %v31 = vsub.f32 %v13, %v27
  %v32 = vadd.f32 %v12, %v25
  %v33 = vadd.f32 %v13, %v27
  %v34 = vlaneseq
  %v35 = vshrl.u32 %v34, 7
  %v36 = vsub.s32 0, %v35
  %v37 = vrot.slane %v19, %v36
  %39 = vset.pattern.permute.xlu0 0
  %40 = vperm.xlu0 %39, %v32
  %v41 = vpop.permute.xlu0 %40
  %44 = vset.pattern.permute.xlu0 0
  %45 = vperm.xlu0 %44, %v33
  %v46 = vpop.permute.xlu0 %45
  %v48 = vmin.f32 %v37, %v41
  %v49 = vmin.f32 %v37, %v46
  %v50 = vlaneseq
  %v51 = vshrl.u32 %v50, 7
  %v52 = vsub.s32 0, %v51
  %v53 = vrot.slane %v18, %v52
  %55 = vset.pattern.permute.xlu0 0
  %56 = vperm.xlu0 %55, %v30
  %v57 = vpop.permute.xlu0 %56
  %60 = vset.pattern.permute.xlu0 0
  %61 = vperm.xlu0 %60, %v31
  %v62 = vpop.permute.xlu0 %61
  %v64 = vmax.f32 %v53, %v57
  %v65 = vmax.f32 %v53, %v62
  %v66 = vsub.f32 %v48, %v64
  %v67 = vsub.f32 %v49, %v65
  %v68 = vmax.f32 %v66, 0.0
  %v69 = vmax.f32 %v67, 0.0
  %v70 = vlaneseq
  %v71 = vshrl.u32 %v70, 7
  %v72 = vsub.s32 1, %v71
  %v73 = vrot.slane %v19, %v72
  %74 = vset.pattern.permute.xlu0 1
  %75 = vperm.xlu0 %74, %v32
  %v76 = vpop.permute.xlu0 %75
  %78 = vset.pattern.permute.xlu0 1
  %79 = vperm.xlu0 %78, %v33
  %v80 = vpop.permute.xlu0 %79
  %v82 = vmin.f32 %v73, %v76
  %v83 = vmin.f32 %v73, %v80
  %v84 = vlaneseq
  %v85 = vshrl.u32 %v84, 7
  %v86 = vsub.s32 1, %v85
  %v87 = vrot.slane %v18, %v86
  %88 = vset.pattern.permute.xlu0 1
  %89 = vperm.xlu0 %88, %v30
  %v90 = vpop.permute.xlu0 %89
  %92 = vset.pattern.permute.xlu0 1
  %93 = vperm.xlu0 %92, %v31
  %v94 = vpop.permute.xlu0 %93
  %v96 = vmax.f32 %v87, %v90
  %v97 = vmax.f32 %v87, %v94
  %v98 = vsub.f32 %v82, %v96
  %v99 = vsub.f32 %v83, %v97
  %v100 = vmax.f32 %v98, 0.0
  %v101 = vmax.f32 %v99, 0.0
  %v102 = vmul.f32 %v68, %v100
  %v103 = vmul.f32 %v69, %v101
  %v104 = vsub.f32 %v19, %v18
  %v106 = vrot.slane %v104, 1
  %v108 = vmul.f32 %v104, %v106
  %v109 = vsub.f32 %v32, %v30
  %v110 = vsub.f32 %v33, %v31
  %113 = vrot.lane.b32.xlu0 %v109, 127
  %v114 = vpop.permute.xlu0 %113
  %115 = vrot.lane.b32.xlu0 %v110, 127
  %v116 = vpop.permute.xlu0 %115
  %v119 = vmul.f32 %v109, %v114
  %v120 = vmul.f32 %v110, %v116
  %v121 = vlaneseq
  %v122 = vshrl.u32 %v121, 7
  %v123 = vsub.s32 0, %v122
  %v124 = vrot.slane %v108, %v123
  %126 = vset.pattern.permute.xlu0 0
  %127 = vperm.xlu0 %126, %v119
  %v128 = vpop.permute.xlu0 %127
  %131 = vset.pattern.permute.xlu0 0
  %132 = vperm.xlu0 %131, %v120
  %v133 = vpop.permute.xlu0 %132
  %v135 = vadd.f32 %v124, %v128
  %v136 = vadd.f32 %v124, %v133
  %v137 = vsub.f32 %v135, %v102
  %v138 = vsub.f32 %v136, %v103
  %v139 = vrcp.pop %v137
  %v140 = vmul.f32 %v102, %v139
  %v141 = vrcp.pop %v138
  %v142 = vmul.f32 %v103, %v141
  %v143 = vlaneseq
  %v144 = vand.u32 %v143, 127
  %vm145 = vcmp.lt.s32.totalorder %v144, 64
  %v146 = vlaneseq
  %v147 = vshrl.u32 %v146, 7
  %v148 = vadd.s32 %v147, 8
  %v149 = vsel %vm145, 1, 0
  %vm150 = vcmp.eq.s32.totalorder %v149, 1
  %v151 = vsel %vm150, %v140, -1.0
  %v152 = vsel %vm150, %v142, -1.0
  %v153 = vmax.f32 %v151, %v152
  %v154 = vrot.slane %v153, 4
  %v155 = vmax.f32 %v153, %v154
  %v156 = vrot.slane %v155, 2
  %v157 = vmax.f32 %v155, %v156
  %v158 = vrot.slane %v157, 1
  %v159 = vmax.f32 %v157, %v158
  %vm160 = vcmp.eq.f32.partialorder %v151, %v159
  %vm161 = vcmp.eq.f32.partialorder %v152, %v159
  %v162 = vsel %vm160, %v147, 16
  %v163 = vsel %vm161, %v148, 16
  %vm164 = vcmp.lt.s32.totalorder %v162, %v163
  %v165 = vsel %vm164, %v162, %v163
  %v166 = vrot.slane %v165, 4
  %vm167 = vcmp.lt.s32.totalorder %v165, %v166
  %v168 = vsel %vm167, %v165, %v166
  %v169 = vrot.slane %v168, 2
  %vm170 = vcmp.lt.s32.totalorder %v168, %v169
  %v171 = vsel %vm170, %v168, %v169
  %v172 = vrot.slane %v171, 1
  %vm173 = vcmp.lt.s32.totalorder %v171, %v172
  %v174 = vsel %vm173, %v171, %v172
  %175 = vmax.xlane.f32.xlu0 %v151
  %v176 = vpop.xlane.xlu0 %175
  %177 = vmax.xlane.f32.xlu0 %v152
  %v178 = vpop.xlane.xlu0 %177
  %vm179 = vcmp.eq.f32.partialorder %v151, %v176
  %vm180 = vcmp.eq.f32.partialorder %v152, %v178
  %v181 = vsel %vm179, %v144, 128
  %v182 = vsel %vm180, %v144, 128
  %v183 = vand.u32 %v181, 65535
  %v184 = vshra.s32 %v181, 16
  %v185 = vcvt.s32.f32 %v183
  %v186 = vcvt.s32.f32 %v184
  %187 = vmin.xlane.f32.xlu0 %v186
  %v188 = vpop.xlane.xlu0 %187
  %vm189 = vcmp.eq.f32.partialorder %v186, %v188
  %v190 = vsel %vm189, %v185, inf
  %191 = vmin.xlane.f32.xlu0 %v190
  %v192 = vpop.xlane.xlu0 %191
  %v193 = vcvt.f32.s32 %v192
  %v194 = vcvt.f32.s32 %v188
  %v195 = vshll.u32 %v194, 16
  %v196 = vadd.s32 %v195, %v193
  %v197 = vand.u32 %v182, 65535
  %v198 = vshra.s32 %v182, 16
  %v199 = vcvt.s32.f32 %v197
  %v200 = vcvt.s32.f32 %v198
  %201 = vmin.xlane.f32.xlu0 %v200
  %v202 = vpop.xlane.xlu0 %201
  %vm203 = vcmp.eq.f32.partialorder %v200, %v202
  %v204 = vsel %vm203, %v199, inf
  %205 = vmin.xlane.f32.xlu0 %v204
  %v206 = vpop.xlane.xlu0 %205
  %v207 = vcvt.f32.s32 %v206
  %v208 = vcvt.f32.s32 %v202
  %v209 = vshll.u32 %v208, 16
  %v210 = vadd.s32 %v209, %v207
  %vm211 = vcmp.gt.f32.partialorder %v159, 0.7
  %vm212 = vcmp.lt.f32.partialorder %v159, 0.3
  %vm213 = vcmp.lt.f32.partialorder %v18, 0.0
  %v214 = vsel %vm213, 1, 0
  %v215 = vrot.slane %v214, 1
  %vm216 = vcmp.ne.s32.totalorder %v215, 0
  %vm217 = vmor %vm213, %vm216
  %vm218 = vcmp.gt.f32.partialorder %v19, 16.0
  %vm219 = vmor %vm217, %vm218
  %v220 = vsel %vm218, 1, 0
  %v221 = vrot.slane %v220, 1
  %vm222 = vcmp.ne.s32.totalorder %v221, 0
  %vm223 = vmor %vm219, %vm222
  %vm224 = vmxor %vm223, 1
  %vm225 = vmand %vm211, %vm224
  %vm226 = vmand %vm212, %vm224
  %vm227 = vcmp.eq.s32.totalorder %v144, %v196
  %vm228 = vcmp.eq.s32.totalorder %v144, %v210
  %v229 = vsel %vm227, 1.0, 0.0
  %v230 = vsel %vm228, 1.0, 0.0
  %v231 = vmax.f32 %v229, %v230
  %v232 = vrot.slane %v231, 4
  %v233 = vmax.f32 %v231, %v232
  %v234 = vrot.slane %v233, 2
  %v235 = vmax.f32 %v233, %v234
  %v236 = vrot.slane %v235, 1
  %v237 = vmax.f32 %v235, %v236
  %vm238 = vcmp.gt.f32.partialorder %v237, 0.0
  %vm239 = vmor %vm225, %vm238
  %vm240 = vmand %vm239, %vm145
  %vm241 = vmxor %vm238, 1
  %vm242 = vmand %vm226, %vm241
  %vm243 = vmand %vm242, %vm145
  %v244 = vsel %vm240, 1, 0
  %v245 = vcvt.s32.f32 %v244
  %v246 = vsel %vm243, 1, 0
  %v247 = vcvt.s32.f32 %v246
  %vm248 = vcmask 1040384
  %v249 = vsel %vm248, %v247, 0.0
  %250 = vadd.xlane.f32.xlu0 %v249
  %v251 = vpop.xlane.xlu0 %250
  %v252 = vrot.slane %v251, 4
  %v253 = vadd.f32 %v251, %v252
  %v254 = vrot.slane %v253, 2
  %v255 = vadd.f32 %v253, %v254
  %v256 = vrot.slane %v255, 1
  %v257 = vadd.f32 %v255, %v256
  %s258 = vtos %v257
  %p259 = scmp.eq.f32.partialorder %s258, 0.0
  %v260 = vcvt.s32.f32 %v149
  %s261 = scalar_select %p259, 1, 0
  %v262 = vstv %s261
  %vm263 = vcmp.eq.s32.totalorder %v262, 1
  %v264 = vsel %vm263, %v260, %v247
  %265 = vst [vmem:[%s2] sm:$0x1] %v159
  %v266 = vcvt.s32.f32 %v174
  %267 = vst [vmem:[%s2 + $0x1] sm:$0x1] %v266
  %268 = vst [vmem:[%s2 + $0x2] sm:$0x1] %v245
  %269 = vst [vmem:[%s2 + $0x3] sm:$0x1] %v264
  // Predicated region
  $region10: #{_box_sampler_device.3} parent=0 // pred_check
    _
  $region11: #{_box_sampler_device.3} parent=0 // pred_check_branch
    %271 = sbr.rel (0) target = $region13
  $region12: #{_box_sampler_device.3} parent=0 // pred_region
    _
  $region13: #{_box_sampler_device.3} parent=0 // pred_fallthru
    _
  // Predicated region
  $region14: #{_box_sampler_device.3} parent=0 // pred_check
    _
  $region15: #{_box_sampler_device.3} parent=0 // pred_check_branch
    %273 = sbr.rel (0) target = $region17
  $region16: #{_box_sampler_device.3} parent=0 // pred_region
    _
  $region17: #{_box_sampler_device.3} parent=0 // pred_fallthru
    _

</llo_original>
